<compile_context>
chip_gen: v5e
topology: v5e:2x2
jax: 0.10.0
libtpu: 0.0.40
codegen_flags: <defaults>
</compile_context>

<pallas_src>
import jax
import jax.numpy as jnp
from jax.experimental import pallas as pl
from jax.experimental.pallas import tpu as pltpu


def _round_up(n, m):
    return ((n + m - 1) // m) * m


def critic_kernel(x_ref,
                  w1_ref, b1_ref,
                  w2_ref, b2_ref,
                  w3_ref, b3_ref,
                  w4_ref, b4_ref,
                  w5_ref, b5_ref,
                  out_ref):
    """Fused 5-layer MLP forward on one batch tile.

    x_ref:  (nS, TB)   activations, batch on the lane axis (bf16 or f32)
    w*_ref: (out, in)  weights (bf16/f32 for layers 1-4, f32 column for layer 5)
    b*_ref: (out, 1)   biases (f32)
    out_ref:(1, TB)    lane-dense output row (f32)
    """
    mm = w1_ref.dtype  # matmul-input dtype (bf16 on the fast path)

    x = x_ref[...]                                                          # (nS, TB)

    h = jnp.dot(w1_ref[...], x, preferred_element_type=jnp.float32) + b1_ref[...]
    h = jnp.maximum(h, 0.0)                                                 # (2nS, TB) f32

    h = jnp.dot(w2_ref[...], h.astype(mm),
                preferred_element_type=jnp.float32) + b2_ref[...]
    h = jnp.maximum(h, 0.0)                                                 # (4nS, TB)

    h = jnp.dot(w3_ref[...], h.astype(mm),
                preferred_element_type=jnp.float32) + b3_ref[...]
    h = jnp.maximum(h, 0.0)                                                 # (4nS, TB)

    h = jnp.dot(w4_ref[...], h.astype(mm),
                preferred_element_type=jnp.float32) + b4_ref[...]
    h = jnp.maximum(h, 0.0)                                                 # (2nS, TB) f32

    # Layer 5 (2nS -> 1): VPU multiply + sublane reduction; result is lane-dense.
    out = jnp.sum(h * w5_ref[...], axis=0, keepdims=True) + b5_ref[...]     # (1, TB) f32
    out_ref[...] = out.astype(out_ref.dtype)


def critic_forward(x, params, *, tile_b=128, use_bf16=True):
    """x: (B, nS) float32.  params: (w1, b1, ..., w5, b5), w_i (out,in), b_i (out,1).

    Returns (B, 1) float32. Small batches run as a single tile; once B > tile_b the
    batch is tiled in `tile_b`-wide (128-multiple) lane-dense chunks.
    """
    B, nS = x.shape
    w1, b1, w2, b2, w3, b3, w4, b4, w5, b5 = params

    mm = jnp.bfloat16 if use_bf16 else jnp.float32
    # Cast MXU operands once here, not per layer inside the kernel.
    w1, w2, w3, w4 = (w.astype(mm) for w in (w1, w2, w3, w4))
    # Layer-5 weight feeds a VPU multiply+reduce -> keep f32 (v5e has no bf16 VPU).
    w5_col = w5.reshape(-1, 1).astype(jnp.float32)                 # (2nS, 1)

    # Batch tile size: multiple of 8 (sublane); once B > tile_b it is a 128-multiple.
    TB = min(tile_b, _round_up(B, 8))
    B_pad = _round_up(B, TB)
    G = B_pad // TB

    # Batch on the lane axis: transpose + zero-pad once in the wrapper (layout plumbing).
    xT = x.T.astype(mm)                                            # (nS, B)
    if B_pad != B:
        xT = jnp.pad(xT, ((0, 0), (0, B_pad - B)))

    args = (xT, w1, b1, w2, b2, w3, b3, w4, b4, w5_col, b5)

    def resident(a):
        # Full-array block, same block index every grid step -> stays resident in VMEM.
        return pl.BlockSpec(a.shape, lambda i: (0, 0))

    in_specs = [pl.BlockSpec((nS, TB), lambda i: (0, i))] + [resident(a) for a in args[1:]]
    out_spec = pl.BlockSpec((1, TB), lambda i: (0, i))

    out = pl.pallas_call(
        critic_kernel,
        out_shape=jax.ShapeDtypeStruct((1, B_pad), jnp.float32),
        grid=(G,),
        in_specs=in_specs,
        out_specs=out_spec,
        compiler_params=pltpu.CompilerParams(
            dimension_semantics=("parallel",)),       # batch tiles are independent
    )(*args)

    return out[0, :B][:, None]                                     # (B, 1)


def init_critic_params(key, nS):
    """nn.Linear-style init: U(-1/sqrt(fan_in), 1/sqrt(fan_in)); weights (out, in)."""
    dims = [nS, nS * 2, nS * 4, nS * 4, nS * 2, 1]
    params = []
    for i in range(5):
        fan_in, fan_out = dims[i], dims[i + 1]
        key, kw, kb = jax.random.split(key, 3)
        bound = 1.0 / (fan_in ** 0.5)
        w = jax.random.uniform(kw, (fan_out, fan_in), jnp.float32, -bound, bound)
        b = jax.random.uniform(kb, (fan_out, 1), jnp.float32, -bound, bound)
        params += [w, b]
    return tuple(params)


def critic_reference(x, params, *, use_bf16=True):
    """Pure-JAX reference, precision-matched to the kernel (bf16 matmul inputs, f32 acc)."""
    w1, b1, w2, b2, w3, b3, w4, b4, w5, b5 = params
    mm = jnp.bfloat16 if use_bf16 else jnp.float32
    h = x
    for w, b in ((w1, b1), (w2, b2), (w3, b3), (w4, b4)):
        h = jnp.dot(h.astype(mm), w.astype(mm).T,
                    preferred_element_type=jnp.float32) + b.T
        h = jnp.maximum(h, 0.0)
    # Final layer mirrors the kernel's f32 multiply + reduce.
    return jnp.sum(h * w5.reshape(1, -1), axis=-1, keepdims=True) + b5.T


if __name__ == "__main__":
    nS, nA = 32, 4   # nA is unused by Critic.forward, matching the PyTorch module
    B = 8

    key = jax.random.PRNGKey(0)
    key, kx, kx2 = jax.random.split(key, 3)
    params = init_critic_params(key, nS)

    # Small batch: single tile.
    x = jax.random.normal(kx, (B, nS), jnp.float32)
    out = jax.block_until_ready(jax.jit(critic_forward)(x, params))
    ref = critic_reference(x, params)
    assert out.shape == (B, 1), out.shape
    assert jnp.allclose(out, ref, atol=1e-3, rtol=1e-3), \
        float(jnp.max(jnp.abs(out - ref)))

    # Larger batch exercises the tiled multi-grid-step path (TB=128, 3 tiles, padded batch).
    B2 = 300
    x2 = jax.random.normal(kx2, (B2, nS), jnp.float32)
    out2 = jax.block_until_ready(jax.jit(critic_forward)(x2, params))
    ref2 = critic_reference(x2, params)
    assert out2.shape == (B2, 1), out2.shape
    assert jnp.allclose(out2, ref2, atol=1e-3, rtol=1e-3), \
        float(jnp.max(jnp.abs(out2 - ref2)))

    print("KERNEL_OK")
</pallas_src>

<mosaic_0001>
module attributes {stable_mosaic.version = 11 : i64} {
  func.func @critic_kernel(%arg0: i32, %arg1: memref<32x8xbf16, #tpu.memory_space<vmem>>, %arg2: memref<64x32xbf16, #tpu.memory_space<vmem>>, %arg3: memref<64x1xf32, #tpu.memory_space<vmem>>, %arg4: memref<128x64xbf16, #tpu.memory_space<vmem>>, %arg5: memref<128x1xf32, #tpu.memory_space<vmem>>, %arg6: memref<128x128xbf16, #tpu.memory_space<vmem>>, %arg7: memref<128x1xf32, #tpu.memory_space<vmem>>, %arg8: memref<64x128xbf16, #tpu.memory_space<vmem>>, %arg9: memref<64x1xf32, #tpu.memory_space<vmem>>, %arg10: memref<64x1xf32, #tpu.memory_space<vmem>>, %arg11: memref<1x1xf32, #tpu.memory_space<vmem>>, %arg12: memref<1x8xf32, #tpu.memory_space<vmem>>) attributes {dimension_semantics = [#tpu.dimension_semantics<parallel>], iteration_bounds = array<i64: 1>, scalar_prefetch = 0 : i64, scratch_operands = 0 : i64, tpu.core_type = #tpu.core_type<tc>, window_params = [{transform_indices = @transform_0, window_bounds = array<i64: 32, 8>}, {pipeline_mode = #tpu.pipeline_mode<synchronous>, transform_indices = @transform_1, window_bounds = array<i64: 64, 32>}, {pipeline_mode = #tpu.pipeline_mode<synchronous>, transform_indices = @transform_2, window_bounds = array<i64: 64, 1>}, {pipeline_mode = #tpu.pipeline_mode<synchronous>, transform_indices = @transform_3, window_bounds = array<i64: 128, 64>}, {pipeline_mode = #tpu.pipeline_mode<synchronous>, transform_indices = @transform_4, window_bounds = array<i64: 128, 1>}, {pipeline_mode = #tpu.pipeline_mode<synchronous>, transform_indices = @transform_5, window_bounds = array<i64: 128, 128>}, {pipeline_mode = #tpu.pipeline_mode<synchronous>, transform_indices = @transform_6, window_bounds = array<i64: 128, 1>}, {pipeline_mode = #tpu.pipeline_mode<synchronous>, transform_indices = @transform_7, window_bounds = array<i64: 64, 128>}, {pipeline_mode = #tpu.pipeline_mode<synchronous>, transform_indices = @transform_8, window_bounds = array<i64: 64, 1>}, {pipeline_mode = #tpu.pipeline_mode<synchronous>, transform_indices = @transform_9, window_bounds = array<i64: 64, 1>}, {pipeline_mode = #tpu.pipeline_mode<synchronous>, transform_indices = @transform_10, window_bounds = array<i64: 1, 1>}, {transform_indices = @transform_11, window_bounds = array<i64: 1, 8>}]} {
    %c0 = arith.constant 0 : index
    %c0_0 = arith.constant 0 : index
    %0 = vector.load %arg1[%c0, %c0_0] : memref<32x8xbf16, #tpu.memory_space<vmem>>, vector<32x8xbf16>
    %c0_1 = arith.constant 0 : index
    %c0_2 = arith.constant 0 : index
    %1 = vector.load %arg2[%c0_1, %c0_2] : memref<64x32xbf16, #tpu.memory_space<vmem>>, vector<64x32xbf16>
    %cst = arith.constant dense<0.000000e+00> : vector<64x8xf32>
    %2 = tpu.matmul %1, %0, %cst {dimension_numbers = #tpu.dot_dimension_numbers<[1], [0], [0], [1], [0, 0, 1, 1], [], []>} : vector<64x32xbf16>, vector<32x8xbf16>, vector<64x8xf32> -> vector<64x8xf32>
    %c0_3 = arith.constant 0 : index
    %c0_4 = arith.constant 0 : index
    %3 = vector.load %arg3[%c0_3, %c0_4] : memref<64x1xf32, #tpu.memory_space<vmem>>, vector<64x1xf32>
    %4 = vector.broadcast %3 : vector<64x1xf32> to vector<64x8xf32>
    %5 = arith.addf %2, %4 : vector<64x8xf32>
    %cst_5 = arith.constant 0.000000e+00 : f32
    %6 = vector.broadcast %cst_5 : f32 to vector<64x8xf32>
    %7 = arith.maximumf %5, %6 : vector<64x8xf32>
    %c0_6 = arith.constant 0 : index
    %c0_7 = arith.constant 0 : index
    %8 = vector.load %arg4[%c0_6, %c0_7] : memref<128x64xbf16, #tpu.memory_space<vmem>>, vector<128x64xbf16>
    %9 = arith.truncf %7 : vector<64x8xf32> to vector<64x8xbf16>
    %cst_8 = arith.constant dense<0.000000e+00> : vector<128x8xf32>
    %10 = tpu.matmul %8, %9, %cst_8 {dimension_numbers = #tpu.dot_dimension_numbers<[1], [0], [0], [1], [0, 0, 1, 1], [], []>} : vector<128x64xbf16>, vector<64x8xbf16>, vector<128x8xf32> -> vector<128x8xf32>
    %c0_9 = arith.constant 0 : index
    %c0_10 = arith.constant 0 : index
    %11 = vector.load %arg5[%c0_9, %c0_10] : memref<128x1xf32, #tpu.memory_space<vmem>>, vector<128x1xf32>
    %12 = vector.broadcast %11 : vector<128x1xf32> to vector<128x8xf32>
    %13 = arith.addf %10, %12 : vector<128x8xf32>
    %cst_11 = arith.constant 0.000000e+00 : f32
    %14 = vector.broadcast %cst_11 : f32 to vector<128x8xf32>
    %15 = arith.maximumf %13, %14 : vector<128x8xf32>
    %c0_12 = arith.constant 0 : index
    %c0_13 = arith.constant 0 : index
    %16 = vector.load %arg6[%c0_12, %c0_13] : memref<128x128xbf16, #tpu.memory_space<vmem>>, vector<128x128xbf16>
    %17 = arith.truncf %15 : vector<128x8xf32> to vector<128x8xbf16>
    %cst_14 = arith.constant dense<0.000000e+00> : vector<128x8xf32>
    %18 = tpu.matmul %16, %17, %cst_14 {dimension_numbers = #tpu.dot_dimension_numbers<[1], [0], [0], [1], [0, 0, 1, 1], [], []>} : vector<128x128xbf16>, vector<128x8xbf16>, vector<128x8xf32> -> vector<128x8xf32>
    %c0_15 = arith.constant 0 : index
    %c0_16 = arith.constant 0 : index
    %19 = vector.load %arg7[%c0_15, %c0_16] : memref<128x1xf32, #tpu.memory_space<vmem>>, vector<128x1xf32>
    %20 = vector.broadcast %19 : vector<128x1xf32> to vector<128x8xf32>
    %21 = arith.addf %18, %20 : vector<128x8xf32>
    %cst_17 = arith.constant 0.000000e+00 : f32
    %22 = vector.broadcast %cst_17 : f32 to vector<128x8xf32>
    %23 = arith.maximumf %21, %22 : vector<128x8xf32>
    %c0_18 = arith.constant 0 : index
    %c0_19 = arith.constant 0 : index
    %24 = vector.load %arg8[%c0_18, %c0_19] : memref<64x128xbf16, #tpu.memory_space<vmem>>, vector<64x128xbf16>
    %25 = arith.truncf %23 : vector<128x8xf32> to vector<128x8xbf16>
    %cst_20 = arith.constant dense<0.000000e+00> : vector<64x8xf32>
    %26 = tpu.matmul %24, %25, %cst_20 {dimension_numbers = #tpu.dot_dimension_numbers<[1], [0], [0], [1], [0, 0, 1, 1], [], []>} : vector<64x128xbf16>, vector<128x8xbf16>, vector<64x8xf32> -> vector<64x8xf32>
    %c0_21 = arith.constant 0 : index
    %c0_22 = arith.constant 0 : index
    %27 = vector.load %arg9[%c0_21, %c0_22] : memref<64x1xf32, #tpu.memory_space<vmem>>, vector<64x1xf32>
    %28 = vector.broadcast %27 : vector<64x1xf32> to vector<64x8xf32>
    %29 = arith.addf %26, %28 : vector<64x8xf32>
    %cst_23 = arith.constant 0.000000e+00 : f32
    %30 = vector.broadcast %cst_23 : f32 to vector<64x8xf32>
    %31 = arith.maximumf %29, %30 : vector<64x8xf32>
    %c0_24 = arith.constant 0 : index
    %c0_25 = arith.constant 0 : index
    %32 = vector.load %arg10[%c0_24, %c0_25] : memref<64x1xf32, #tpu.memory_space<vmem>>, vector<64x1xf32>
    %33 = vector.broadcast %32 : vector<64x1xf32> to vector<64x8xf32>
    %34 = arith.mulf %31, %33 : vector<64x8xf32>
    %cst_26 = arith.constant dense<0.000000e+00> : vector<8xf32>
    %35 = vector.multi_reduction <add>, %34, %cst_26 [0] : vector<64x8xf32> to vector<8xf32>
    %36 = vector.shape_cast %35 : vector<8xf32> to vector<1x8xf32>
    %c0_27 = arith.constant 0 : index
    %c0_28 = arith.constant 0 : index
    %37 = vector.load %arg11[%c0_27, %c0_28] : memref<1x1xf32, #tpu.memory_space<vmem>>, vector<1x1xf32>
    %38 = vector.broadcast %37 : vector<1x1xf32> to vector<1x8xf32>
    %39 = arith.addf %36, %38 : vector<1x8xf32>
    %c0_29 = arith.constant 0 : index
    %c0_30 = arith.constant 0 : index
    %40 = vector.load %arg12[%c0_29, %c0_30] : memref<1x8xf32, #tpu.memory_space<vmem>>, vector<1x8xf32>
    tpu.vector_store %arg12[%c0_29, %c0_30], %39 {strides = array<i32>} : memref<1x8xf32, #tpu.memory_space<vmem>>, vector<1x8xf32>,
    return
  }
  func.func @transform_0(%arg0: i32) -> (i32, i32) {
    %c0_i32 = arith.constant 0 : i32
    %c0_i32_0 = arith.constant 0 : i32
    return %c0_i32, %arg0 : i32, i32
  }
  func.func @transform_1(%arg0: i32) -> (i32, i32) {
    %c0_i32 = arith.constant 0 : i32
    %c0_i32_0 = arith.constant 0 : i32
    %c0_i32_1 = arith.constant 0 : i32
    return %c0_i32, %c0_i32_0 : i32, i32
  }
  func.func @transform_2(%arg0: i32) -> (i32, i32) {
    %c0_i32 = arith.constant 0 : i32
    %c0_i32_0 = arith.constant 0 : i32
    %c0_i32_1 = arith.constant 0 : i32
    return %c0_i32, %c0_i32_0 : i32, i32
  }
  func.func @transform_3(%arg0: i32) -> (i32, i32) {
    %c0_i32 = arith.constant 0 : i32
    %c0_i32_0 = arith.constant 0 : i32
    %c0_i32_1 = arith.constant 0 : i32
    return %c0_i32, %c0_i32_0 : i32, i32
  }
  func.func @transform_4(%arg0: i32) -> (i32, i32) {
    %c0_i32 = arith.constant 0 : i32
    %c0_i32_0 = arith.constant 0 : i32
    %c0_i32_1 = arith.constant 0 : i32
    return %c0_i32, %c0_i32_0 : i32, i32
  }
  func.func @transform_5(%arg0: i32) -> (i32, i32) {
    %c0_i32 = arith.constant 0 : i32
    %c0_i32_0 = arith.constant 0 : i32
    %c0_i32_1 = arith.constant 0 : i32
    return %c0_i32, %c0_i32_0 : i32, i32
  }
  func.func @transform_6(%arg0: i32) -> (i32, i32) {
    %c0_i32 = arith.constant 0 : i32
    %c0_i32_0 = arith.constant 0 : i32
    %c0_i32_1 = arith.constant 0 : i32
    return %c0_i32, %c0_i32_0 : i32, i32
  }
  func.func @transform_7(%arg0: i32) -> (i32, i32) {
    %c0_i32 = arith.constant 0 : i32
    %c0_i32_0 = arith.constant 0 : i32
    %c0_i32_1 = arith.constant 0 : i32
    return %c0_i32, %c0_i32_0 : i32, i32
  }
  func.func @transform_8(%arg0: i32) -> (i32, i32) {
    %c0_i32 = arith.constant 0 : i32
    %c0_i32_0 = arith.constant 0 : i32
    %c0_i32_1 = arith.constant 0 : i32
    return %c0_i32, %c0_i32_0 : i32, i32
  }
  func.func @transform_9(%arg0: i32) -> (i32, i32) {
    %c0_i32 = arith.constant 0 : i32
    %c0_i32_0 = arith.constant 0 : i32
    %c0_i32_1 = arith.constant 0 : i32
    return %c0_i32, %c0_i32_0 : i32, i32
  }
  func.func @transform_10(%arg0: i32) -> (i32, i32) {
    %c0_i32 = arith.constant 0 : i32
    %c0_i32_0 = arith.constant 0 : i32
    %c0_i32_1 = arith.constant 0 : i32
    return %c0_i32, %c0_i32_0 : i32, i32
  }
  func.func @transform_11(%arg0: i32) -> (i32, i32) {
    %c0_i32 = arith.constant 0 : i32
    %c0_i32_0 = arith.constant 0 : i32
    return %c0_i32, %arg0 : i32, i32
  }
}

</mosaic_0001>

<llo_original>
// kernel: critic_forward.1
$region0: #{critic_forward.1}
  #allocation0 [shape = 'u32[]', space=smem, size = 0x4, offset = 0x4, fixed_abs, tag = 'smem constant byte address 0x4 - core index']
  #allocation1 [shape = 'u32[72,128]{1,0:T(1,128)}', space=vmem, size = 0x9000, scoped, tag = 'internal scratch']
  #allocation2 [shape = 'f32[1,1]{1,0:T(1,128)S(1)}', space=vmem, size = 0x200, scoped, tag = 'scoped memory for critic_forward.1']
  %s0 = inlined_call_operand.vmem [shape: bf16[32,8], index: 0, kind: input, shape index: {}]
  %s1 = inlined_call_operand.vmem [shape: bf16[64,32], index: 1, kind: input, shape index: {}]
  %s2 = inlined_call_operand.vmem [shape: f32[64,1], index: 2, kind: input, shape index: {}]
  %s3 = inlined_call_operand.vmem [shape: bf16[128,64], index: 3, kind: input, shape index: {}]
  %s4 = inlined_call_operand.vmem [shape: f32[128,1], index: 4, kind: input, shape index: {}]
  %s5 = inlined_call_operand.vmem [shape: bf16[128,128], index: 5, kind: input, shape index: {}]
  %s6 = inlined_call_operand.vmem [shape: f32[128,1], index: 6, kind: input, shape index: {}]
  %s7 = inlined_call_operand.vmem [shape: bf16[64,128], index: 7, kind: input, shape index: {}]
  %s8 = inlined_call_operand.vmem [shape: f32[64,1], index: 8, kind: input, shape index: {}]
  %s9 = inlined_call_operand.vmem [shape: f32[64,1], index: 9, kind: input, shape index: {}]
  %s10 = inlined_call_operand.<no memory space> [shape: f32[1,1], index: 10, kind: input, shape index: {}]
  %s11 = inlined_call_operand.hbm [shape: f32[1,8], index: 11, kind: output, shape index: {}]
  %s12 = sld [smem:[#allocation0]]
  $region54: #{critic_forward.1} parent=0
    _
  %s14 = ssub.s32 1, %s12
  %s15 = scalar_select 0, %s14, %s12
  %v16 = vstv %s10
  %17 = vst [vmem:[#allocation2] sm:$0x1] %v16
  $region1: #{critic_forward.1} parent=0
    #allocation3 [shape = 'u8[512]{0}', space=vmem, size = 0x400, scoped, tag = 'output window, operand 0, single buffered']
    #allocation4 [shape = 's32[1]{0}', space=sflag, size = 0x4, scoped, tag = 'scoped memory for critic_forward.1']
    %18 = vsyncpa [#allocation4], 0
    // Predicated region
    $region2: #{critic_forward.1} parent=1 // pred_check
      _
    $region3: #{critic_forward.1} parent=1 // pred_check_branch
      %20 = sbr.rel (0) target = $region5
    $region4: #{critic_forward.1} parent=1 // pred_region
      _
    $region5: #{critic_forward.1} parent=1 // pred_fallthru
      _
    // Predicated region
    $region6: #{critic_forward.1} parent=1 // pred_check
      _
    $region7: #{critic_forward.1} parent=1 // pred_check_branch
      %22 = sbr.rel (0) target = $region9
    $region8: #{critic_forward.1} parent=1 // pred_region
      _
    $region9: #{critic_forward.1} parent=1 // pred_fallthru
      _
    // Predicated region
    $region10: #{critic_forward.1} parent=1 // pred_check
      _
    $region11: #{critic_forward.1} parent=1 // pred_check_branch
      %24 = sbr.rel (0) target = $region13
    $region12: #{critic_forward.1} parent=1 // pred_region
      _
    $region13: #{critic_forward.1} parent=1 // pred_fallthru
      _
    // Predicated region
    $region14: #{critic_forward.1} parent=1 // pred_check
      _
    $region15: #{critic_forward.1} parent=1 // pred_check_branch
      %26 = sbr.rel (0) target = $region17
    $region16: #{critic_forward.1} parent=1 // pred_region
      _
    $region17: #{critic_forward.1} parent=1 // pred_fallthru
      _
    // Predicated region
    $region18: #{critic_forward.1} parent=1 // pred_check
      _
    $region19: #{critic_forward.1} parent=1 // pred_check_branch
      %28 = sbr.rel (0) target = $region21
    $region20: #{critic_forward.1} parent=1 // pred_region
      _
    $region21: #{critic_forward.1} parent=1 // pred_fallthru
      _
    // Predicated region
    $region22: #{critic_forward.1} parent=1 // pred_check
      _
    $region23: #{critic_forward.1} parent=1 // pred_check_branch
      %30 = sbr.rel (0) target = $region25
    $region24: #{critic_forward.1} parent=1 // pred_region
      _
    $region25: #{critic_forward.1} parent=1 // pred_fallthru
      _
    // Predicated region
    $region26: #{critic_forward.1} parent=1 // pred_check
      _
    $region27: #{critic_forward.1} parent=1 // pred_check_branch
      %32 = sbr.rel (0) target = $region29
    $region28: #{critic_forward.1} parent=1 // pred_region
      _
    $region29: #{critic_forward.1} parent=1 // pred_fallthru
      _
    // Predicated region
    $region30: #{critic_forward.1} parent=1 // pred_check
      _
    $region31: #{critic_forward.1} parent=1 // pred_check_branch
      %34 = sbr.rel (0) target = $region33
    $region32: #{critic_forward.1} parent=1 // pred_region
      _
    $region33: #{critic_forward.1} parent=1 // pred_fallthru
      _
    // Predicated region
    $region34: #{critic_forward.1} parent=1 // pred_check
      _
    $region35: #{critic_forward.1} parent=1 // pred_check_branch
      %36 = sbr.rel (0) target = $region37
    $region36: #{critic_forward.1} parent=1 // pred_region
      _
    $region37: #{critic_forward.1} parent=1 // pred_fallthru
      _
    // Predicated region
    $region38: #{critic_forward.1} parent=1 // pred_check
      _
    $region39: #{critic_forward.1} parent=1 // pred_check_branch
      %38 = sbr.rel (0) target = $region41
    $region40: #{critic_forward.1} parent=1 // pred_region
      _
    $region41: #{critic_forward.1} parent=1 // pred_fallthru
      _
    // Predicated region
    $region42: #{critic_forward.1} parent=1 // pred_check
      _
    $region43: #{critic_forward.1} parent=1 // pred_check_branch
      %40 = sbr.rel (0) target = $region45
    $region44: #{critic_forward.1} parent=1 // pred_region
      _
    $region45: #{critic_forward.1} parent=1 // pred_fallthru
      _
    %v42 = vld [vmem:[%s0] sm:$0xf]
    %v43 = vld [vmem:[%s0 + $0x4] sm:$0xf]
    %v44 = vld [vmem:[%s0 + $0x8] sm:$0xf]
    %v45 = vld [vmem:[%s0 + $0xc] sm:$0xf]
    %v46 = vld [vmem:[%s1] sm:$0xf]
    %v47 = vld [vmem:[%s1 + $0x4] sm:$0xf]
    %v48 = vld [vmem:[%s1 + $0x8] sm:$0xf]
    %v49 = vld [vmem:[%s1 + $0xc] sm:$0xf]
    %v50 = vld [vmem:[%s1 + $0x10] sm:$0xf]
    %v51 = vld [vmem:[%s1 + $0x14] sm:$0xf]
    %v52 = vld [vmem:[%s1 + $0x18] sm:$0xf]
    %v53 = vld [vmem:[%s1 + $0x1c] sm:$0xf]
    %v54 = vld [vmem:[%s2] sm:$0xff]
    %v55 = vld [vmem:[%s2 + $0x8] sm:$0xff]
    %v56 = vld [vmem:[%s2 + $0x10] sm:$0xff]
    %v57 = vld [vmem:[%s2 + $0x18] sm:$0xff]
    %v58 = vld [vmem:[%s2 + $0x20] sm:$0xff]
    %v59 = vld [vmem:[%s2 + $0x28] sm:$0xff]
    %v60 = vld [vmem:[%s2 + $0x30] sm:$0xff]
    %v61 = vld [vmem:[%s2 + $0x38] sm:$0xff]
    %63 = vset.pattern.permute.xlu0 0
    %64 = vperm.xlu0 %63, %v54
    %v65 = vpop.permute.xlu0 %64
    %68 = vset.pattern.permute.xlu0 0
    %69 = vperm.xlu0 %68, %v55
    %v70 = vpop.permute.xlu0 %69
    %73 = vset.pattern.permute.xlu0 0
    %74 = vperm.xlu0 %73, %v56
    %v75 = vpop.permute.xlu0 %74
    %78 = vset.pattern.permute.xlu0 0
    %79 = vperm.xlu0 %78, %v57
    %v80 = vpop.permute.xlu0 %79
    %83 = vset.pattern.permute.xlu0 0
    %84 = vperm.xlu0 %83, %v58
    %v85 = vpop.permute.xlu0 %84
    %88 = vset.pattern.permute.xlu0 0
    %89 = vperm.xlu0 %88, %v59
    %v90 = vpop.permute.xlu0 %89
    %93 = vset.pattern.permute.xlu0 0
    %94 = vperm.xlu0 %93, %v60
    %v95 = vpop.permute.xlu0 %94
    %98 = vset.pattern.permute.xlu0 0
    %99 = vperm.xlu0 %98, %v61
    %v100 = vpop.permute.xlu0 %99
    %v110 = vunpack.c.l.b16 %v46
    %v111 = vunpack.c.l.b16 %v47
    %v112 = vunpack.c.l.b16 %v48
    %v113 = vunpack.c.l.b16 %v49
    %v114 = vunpack.c.l.b16 %v50
    %v115 = vunpack.c.l.b16 %v51
    %v116 = vunpack.c.l.b16 %v52
    %v117 = vunpack.c.l.b16 %v53
    %v118 = vpack.c.b16 %v111, %v110
    %v119 = vpack.c.b16 %v113, %v112
    %v120 = vpack.c.b16 %v115, %v114
    %v121 = vpack.c.b16 %v117, %v116
    %v126 = vunpack.c.l.b16 %v42
    %v127 = vunpack.c.l.b16 %v43
    %v128 = vunpack.c.l.b16 %v44
    %v129 = vunpack.c.l.b16 %v45
    %v130 = vpack.c.b16 %v127, %v126
    %v131 = vpack.c.b16 %v129, %v128
    %vm134 = vcmask 261120
    %v136 = vsel %vm134, %v118, 0
    %v139 = vsel %vm134, %v119, 0
    %v142 = vsel %vm134, %v120, 0
    %v145 = vsel %vm134, %v121, 0
    %147 = vmatpush.bf16.msra.mxu0 0
    %148 = vmatpush.bf16.msra.mxu0 0
    %149 = vmatpush.bf16.msra.mxu0 0
    %150 = vmatpush.bf16.msra.mxu0 0
    %151 = vmatpush.bf16.msra.mxu0 0
    %152 = vmatpush.bf16.msra.mxu0 0
    %153 = vmatpush.bf16.msra.mxu0 %v131
    %154 = vmatpush.bf16.msra.mxu0 %v130
    %155 = vmatmul.bf16.gmra.mxu0 %v136
    %v156 = vpop.f32.mrf.mxu0
    %v157 = vadd.f32 %v65, %v156
    %v158 = vpop.f32.mrf.mxu0
    %v159 = vadd.f32 %v70, %v158
    %160 = vmatmul.bf16.gmra.mxu0 %v139
    %v161 = vpop.f32.mrf.mxu0
    %v162 = vadd.f32 %v75, %v161
    %v163 = vpop.f32.mrf.mxu0
    %v164 = vadd.f32 %v80, %v163
    %165 = vmatmul.bf16.gmra.mxu0 %v142
    %v166 = vpop.f32.mrf.mxu0
    %v167 = vadd.f32 %v85, %v166
    %v168 = vpop.f32.mrf.mxu0
    %v169 = vadd.f32 %v90, %v168
    %170 = vmatmul.bf16.gmra.mxu0 %v145
    %v171 = vpop.f32.mrf.mxu0
    %v172 = vadd.f32 %v95, %v171
    %v173 = vpop.f32.mrf.mxu0
    %v174 = vadd.f32 %v100, %v173
    %175 = vdwg.mxu0
    %v176 = vmax.f32 %v157, 0.0
    %v177 = vmax.f32 %v159, 0.0
    %v178 = vmax.f32 %v162, 0.0
    %v179 = vmax.f32 %v164, 0.0
    %v180 = vmax.f32 %v167, 0.0
    %v181 = vmax.f32 %v169, 0.0
    %v182 = vmax.f32 %v172, 0.0
    %v183 = vmax.f32 %v174, 0.0
    %v184 = vld [vmem:[%s3] sm:$0xf]
    %v185 = vld [vmem:[%s3 + $0x4] sm:$0xf]
    %v186 = vld [vmem:[%s3 + $0x8] sm:$0xf]
    %v187 = vld [vmem:[%s3 + $0xc] sm:$0xf]
    %v188 = vld [vmem:[%s3 + $0x10] sm:$0xf]
    %v189 = vld [vmem:[%s3 + $0x14] sm:$0xf]
    %v190 = vld [vmem:[%s3 + $0x18] sm:$0xf]
    %v191 = vld [vmem:[%s3 + $0x1c] sm:$0xf]
    %v192 = vld [vmem:[%s3 + $0x20] sm:$0xf]
    %v193 = vld [vmem:[%s3 + $0x24] sm:$0xf]
    %v194 = vld [vmem:[%s3 + $0x28] sm:$0xf]
    %v195 = vld [vmem:[%s3 + $0x2c] sm:$0xf]
    %v196 = vld [vmem:[%s3 + $0x30] sm:$0xf]
    %v197 = vld [vmem:[%s3 + $0x34] sm:$0xf]
    %v198 = vld [vmem:[%s3 + $0x38] sm:$0xf]
    %v199 = vld [vmem:[%s3 + $0x3c] sm:$0xf]
    %v200 = vpack.c.bf16 %v177, %v176
    %v201 = vpack.c.bf16 %v179, %v178
    %v202 = vpack.c.bf16 %v181, %v180
    %v203 = vpack.c.bf16 %v183, %v182
    %v204 = vld [vmem:[%s4] sm:$0xff]
    %v205 = vld [vmem:[%s4 + $0x8] sm:$0xff]
    %v206 = vld [vmem:[%s4 + $0x10] sm:$0xff]
    %v207 = vld [vmem:[%s4 + $0x18] sm:$0xff]
    %v208 = vld [vmem:[%s4 + $0x20] sm:$0xff]
    %v209 = vld [vmem:[%s4 + $0x28] sm:$0xff]
    %v210 = vld [vmem:[%s4 + $0x30] sm:$0xff]
    %v211 = vld [vmem:[%s4 + $0x38] sm:$0xff]
    %v212 = vld [vmem:[%s4 + $0x40] sm:$0xff]
    %v213 = vld [vmem:[%s4 + $0x48] sm:$0xff]
    %v214 = vld [vmem:[%s4 + $0x50] sm:$0xff]
    %v215 = vld [vmem:[%s4 + $0x58] sm:$0xff]
    %v216 = vld [vmem:[%s4 + $0x60] sm:$0xff]
    %v217 = vld [vmem:[%s4 + $0x68] sm:$0xff]
    %v218 = vld [vmem:[%s4 + $0x70] sm:$0xff]
    %v219 = vld [vmem:[%s4 + $0x78] sm:$0xff]
    %221 = vset.pattern.permute.xlu0 0
    %222 = vperm.xlu0 %221, %v204
    %v223 = vpop.permute.xlu0 %222
    %226 = vset.pattern.permute.xlu0 0
    %227 = vperm.xlu0 %226, %v205
    %v228 = vpop.permute.xlu0 %227
    %231 = vset.pattern.permute.xlu0 0
    %232 = vperm.xlu0 %231, %v206
    %v233 = vpop.permute.xlu0 %232
    %236 = vset.pattern.permute.xlu0 0
    %237 = vperm.xlu0 %236, %v207
    %v238 = vpop.permute.xlu0 %237
    %241 = vset.pattern.permute.xlu0 0
    %242 = vperm.xlu0 %241, %v208
    %v243 = vpop.permute.xlu0 %242
    %246 = vset.pattern.permute.xlu0 0
    %247 = vperm.xlu0 %246, %v209
    %v248 = vpop.permute.xlu0 %247
    %251 = vset.pattern.permute.xlu0 0
    %252 = vperm.xlu0 %251, %v210
    %v253 = vpop.permute.xlu0 %252
    %256 = vset.pattern.permute.xlu0 0
    %257 = vperm.xlu0 %256, %v211
    %v258 = vpop.permute.xlu0 %257
    %261 = vset.pattern.permute.xlu0 0
    %262 = vperm.xlu0 %261, %v212
    %v263 = vpop.permute.xlu0 %262
    %266 = vset.pattern.permute.xlu0 0
    %267 = vperm.xlu0 %266, %v213
    %v268 = vpop.permute.xlu0 %267
    %271 = vset.pattern.permute.xlu0 0
    %272 = vperm.xlu0 %271, %v214
    %v273 = vpop.permute.xlu0 %272
    %276 = vset.pattern.permute.xlu0 0
    %277 = vperm.xlu0 %276, %v215
    %v278 = vpop.permute.xlu0 %277
    %281 = vset.pattern.permute.xlu0 0
    %282 = vperm.xlu0 %281, %v216
    %v283 = vpop.permute.xlu0 %282
    %286 = vset.pattern.permute.xlu0 0
    %287 = vperm.xlu0 %286, %v217
    %v288 = vpop.permute.xlu0 %287
    %291 = vset.pattern.permute.xlu0 0
    %292 = vperm.xlu0 %291, %v218
    %v293 = vpop.permute.xlu0 %292
    %296 = vset.pattern.permute.xlu0 0
    %297 = vperm.xlu0 %296, %v219
    %v298 = vpop.permute.xlu0 %297
    %v316 = vunpack.c.l.b16 %v184
    %v317 = vunpack.c.l.b16 %v185
    %v318 = vunpack.c.l.b16 %v186
    %v319 = vunpack.c.l.b16 %v187
    %v320 = vunpack.c.l.b16 %v188
    %v321 = vunpack.c.l.b16 %v189
    %v322 = vunpack.c.l.b16 %v190
    %v323 = vunpack.c.l.b16 %v191
    %v324 = vunpack.c.l.b16 %v192
    %v325 = vunpack.c.l.b16 %v193
    %v326 = vunpack.c.l.b16 %v194
    %v327 = vunpack.c.l.b16 %v195
    %v328 = vunpack.c.l.b16 %v196
    %v329 = vunpack.c.l.b16 %v197
    %v330 = vunpack.c.l.b16 %v198
    %v331 = vunpack.c.l.b16 %v199
    %v332 = vpack.c.b16 %v317, %v316
    %v333 = vpack.c.b16 %v319, %v318
    %v334 = vpack.c.b16 %v321, %v320
    %v335 = vpack.c.b16 %v323, %v322
    %v336 = vpack.c.b16 %v325, %v324
    %v337 = vpack.c.b16 %v327, %v326
    %v338 = vpack.c.b16 %v329, %v328
    %v339 = vpack.c.b16 %v331, %v330
    %vm340 = vcmask 523264
    %v342 = vsel %vm340, %v332, 0
    %v345 = vsel %vm340, %v333, 0
    %v348 = vsel %vm340, %v334, 0
    %v351 = vsel %vm340, %v335, 0
    %v354 = vsel %vm340, %v336, 0
    %v357 = vsel %vm340, %v337, 0
    %v360 = vsel %vm340, %v338, 0
    %v363 = vsel %vm340, %v339, 0
    %365 = vmatpush.bf16.msra.mxu0 0
    %366 = vmatpush.bf16.msra.mxu0 0
    %367 = vmatpush.bf16.msra.mxu0 0
    %368 = vmatpush.bf16.msra.mxu0 0
    %369 = vmatpush.bf16.msra.mxu0 %v203
    %370 = vmatpush.bf16.msra.mxu0 %v202
    %371 = vmatpush.bf16.msra.mxu0 %v201
    %372 = vmatpush.bf16.msra.mxu0 %v200
    %373 = vmatmul.bf16.gmra.mxu0 %v342
    %v374 = vpop.f32.mrf.mxu0
    %v375 = vadd.f32 %v223, %v374
    %v376 = vpop.f32.mrf.mxu0
    %v377 = vadd.f32 %v228, %v376
    %378 = vmatmul.bf16.gmra.mxu0 %v345
    %v379 = vpop.f32.mrf.mxu0
    %v380 = vadd.f32 %v233, %v379
    %v381 = vpop.f32.mrf.mxu0
    %v382 = vadd.f32 %v238, %v381
    %383 = vmatmul.bf16.gmra.mxu0 %v348
    %v384 = vpop.f32.mrf.mxu0
    %v385 = vadd.f32 %v243, %v384
    %v386 = vpop.f32.mrf.mxu0
    %v387 = vadd.f32 %v248, %v386
    %388 = vmatmul.bf16.gmra.mxu0 %v351
    %v389 = vpop.f32.mrf.mxu0
    %v390 = vadd.f32 %v253, %v389
    %v391 = vpop.f32.mrf.mxu0
    %v392 = vadd.f32 %v258, %v391
    %393 = vmatmul.bf16.gmra.mxu0 %v354
    %v394 = vpop.f32.mrf.mxu0
    %v395 = vadd.f32 %v263, %v394
    %v396 = vpop.f32.mrf.mxu0
    %v397 = vadd.f32 %v268, %v396
    %398 = vmatmul.bf16.gmra.mxu0 %v357
    %v399 = vpop.f32.mrf.mxu0
    %v400 = vadd.f32 %v273, %v399
    %v401 = vpop.f32.mrf.mxu0
    %v402 = vadd.f32 %v278, %v401
    %403 = vmatmul.bf16.gmra.mxu0 %v360
    %v404 = vpop.f32.mrf.mxu0
    %v405 = vadd.f32 %v283, %v404
    %v406 = vpop.f32.mrf.mxu0
    %v407 = vadd.f32 %v288, %v406
    %408 = vmatmul.bf16.gmra.mxu0 %v363
    %v409 = vpop.f32.mrf.mxu0
    %v410 = vadd.f32 %v293, %v409
    %v411 = vpop.f32.mrf.mxu0
    %v412 = vadd.f32 %v298, %v411
    %413 = vdwg.mxu0
    %v414 = vmax.f32 %v375, 0.0
    %v415 = vmax.f32 %v377, 0.0
    %v416 = vmax.f32 %v380, 0.0
    %v417 = vmax.f32 %v382, 0.0
    %v418 = vmax.f32 %v385, 0.0
    %v419 = vmax.f32 %v387, 0.0
    %v420 = vmax.f32 %v390, 0.0
    %v421 = vmax.f32 %v392, 0.0
    %v422 = vmax.f32 %v395, 0.0
    %v423 = vmax.f32 %v397, 0.0
    %v424 = vmax.f32 %v400, 0.0
    %v425 = vmax.f32 %v402, 0.0
    %v426 = vmax.f32 %v405, 0.0
    %v427 = vmax.f32 %v407, 0.0
    %v428 = vmax.f32 %v410, 0.0
    %v429 = vmax.f32 %v412, 0.0
    %v430 = vld [vmem:[%s5] sm:$0xf]
    %v431 = vld [vmem:[%s5 + $0x4] sm:$0xf]
    %v432 = vld [vmem:[%s5 + $0x8] sm:$0xf]
    %v433 = vld [vmem:[%s5 + $0xc] sm:$0xf]
    %v434 = vld [vmem:[%s5 + $0x10] sm:$0xf]
    %v435 = vld [vmem:[%s5 + $0x14] sm:$0xf]
    %v436 = vld [vmem:[%s5 + $0x18] sm:$0xf]
    %v437 = vld [vmem:[%s5 + $0x1c] sm:$0xf]
    %v438 = vld [vmem:[%s5 + $0x20] sm:$0xf]
    %v439 = vld [vmem:[%s5 + $0x24] sm:$0xf]
    %v440 = vld [vmem:[%s5 + $0x28] sm:$0xf]
    %v441 = vld [vmem:[%s5 + $0x2c] sm:$0xf]
    %v442 = vld [vmem:[%s5 + $0x30] sm:$0xf]
    %v443 = vld [vmem:[%s5 + $0x34] sm:$0xf]
    %v444 = vld [vmem:[%s5 + $0x38] sm:$0xf]
    %v445 = vld [vmem:[%s5 + $0x3c] sm:$0xf]
    %v446 = vpack.c.bf16 %v415, %v414
    %v447 = vpack.c.bf16 %v417, %v416
    %v448 = vpack.c.bf16 %v419, %v418
    %v449 = vpack.c.bf16 %v421, %v420
    %v450 = vpack.c.bf16 %v423, %v422
    %v451 = vpack.c.bf16 %v425, %v424
    %v452 = vpack.c.bf16 %v427, %v426
    %v453 = vpack.c.bf16 %v429, %v428
    %v454 = vld [vmem:[%s6] sm:$0xff]
    %v455 = vld [vmem:[%s6 + $0x8] sm:$0xff]
    %v456 = vld [vmem:[%s6 + $0x10] sm:$0xff]
    %v457 = vld [vmem:[%s6 + $0x18] sm:$0xff]
    %v458 = vld [vmem:[%s6 + $0x20] sm:$0xff]
    %v459 = vld [vmem:[%s6 + $0x28] sm:$0xff]
    %v460 = vld [vmem:[%s6 + $0x30] sm:$0xff]
    %v461 = vld [vmem:[%s6 + $0x38] sm:$0xff]
    %v462 = vld [vmem:[%s6 + $0x40] sm:$0xff]
    %v463 = vld [vmem:[%s6 + $0x48] sm:$0xff]
    %v464 = vld [vmem:[%s6 + $0x50] sm:$0xff]
    %v465 = vld [vmem:[%s6 + $0x58] sm:$0xff]
    %v466 = vld [vmem:[%s6 + $0x60] sm:$0xff]
    %v467 = vld [vmem:[%s6 + $0x68] sm:$0xff]
    %v468 = vld [vmem:[%s6 + $0x70] sm:$0xff]
    %v469 = vld [vmem:[%s6 + $0x78] sm:$0xff]
    %471 = vset.pattern.permute.xlu0 0
    %472 = vperm.xlu0 %471, %v454
    %v473 = vpop.permute.xlu0 %472
    %476 = vset.pattern.permute.xlu0 0
    %477 = vperm.xlu0 %476, %v455
    %v478 = vpop.permute.xlu0 %477
    %481 = vset.pattern.permute.xlu0 0
    %482 = vperm.xlu0 %481, %v456
    %v483 = vpop.permute.xlu0 %482
    %486 = vset.pattern.permute.xlu0 0
    %487 = vperm.xlu0 %486, %v457
    %v488 = vpop.permute.xlu0 %487
    %491 = vset.pattern.permute.xlu0 0
    %492 = vperm.xlu0 %491, %v458
    %v493 = vpop.permute.xlu0 %492
    %496 = vset.pattern.permute.xlu0 0
    %497 = vperm.xlu0 %496, %v459
    %v498 = vpop.permute.xlu0 %497
    %501 = vset.pattern.permute.xlu0 0
    %502 = vperm.xlu0 %501, %v460
    %v503 = vpop.permute.xlu0 %502
    %506 = vset.pattern.permute.xlu0 0
    %507 = vperm.xlu0 %506, %v461
    %v508 = vpop.permute.xlu0 %507
    %511 = vset.pattern.permute.xlu0 0
    %512 = vperm.xlu0 %511, %v462
    %v513 = vpop.permute.xlu0 %512
    %516 = vset.pattern.permute.xlu0 0
    %517 = vperm.xlu0 %516, %v463
    %v518 = vpop.permute.xlu0 %517
    %521 = vset.pattern.permute.xlu0 0
    %522 = vperm.xlu0 %521, %v464
    %v523 = vpop.permute.xlu0 %522
    %526 = vset.pattern.permute.xlu0 0
    %527 = vperm.xlu0 %526, %v465
    %v528 = vpop.permute.xlu0 %527
    %531 = vset.pattern.permute.xlu0 0
    %532 = vperm.xlu0 %531, %v466
    %v533 = vpop.permute.xlu0 %532
    %536 = vset.pattern.permute.xlu0 0
    %537 = vperm.xlu0 %536, %v467
    %v538 = vpop.permute.xlu0 %537
    %541 = vset.pattern.permute.xlu0 0
    %542 = vperm.xlu0 %541, %v468
    %v543 = vpop.permute.xlu0 %542
    %546 = vset.pattern.permute.xlu0 0
    %547 = vperm.xlu0 %546, %v469
    %v548 = vpop.permute.xlu0 %547
    %v566 = vunpack.c.l.b16 %v430
    %v567 = vunpack.c.l.b16 %v431
    %v568 = vunpack.c.l.b16 %v432
    %v569 = vunpack.c.l.b16 %v433
    %v570 = vunpack.c.l.b16 %v434
    %v571 = vunpack.c.l.b16 %v435
    %v572 = vunpack.c.l.b16 %v436
    %v573 = vunpack.c.l.b16 %v437
    %v574 = vunpack.c.l.b16 %v438
    %v575 = vunpack.c.l.b16 %v439
    %v576 = vunpack.c.l.b16 %v440
    %v577 = vunpack.c.l.b16 %v441
    %v578 = vunpack.c.l.b16 %v442
    %v579 = vunpack.c.l.b16 %v443
    %v580 = vunpack.c.l.b16 %v444
    %v581 = vunpack.c.l.b16 %v445
    %v582 = vpack.c.b16 %v567, %v566
    %v583 = vpack.c.b16 %v569, %v568
    %v584 = vpack.c.b16 %v571, %v570
    %v585 = vpack.c.b16 %v573, %v572
    %v586 = vpack.c.b16 %v575, %v574
    %v587 = vpack.c.b16 %v577, %v576
    %v588 = vpack.c.b16 %v579, %v578
    %v589 = vpack.c.b16 %v581, %v580
    %598 = vmatpush.bf16.msra.mxu0 %v453
    %599 = vmatpush.bf16.msra.mxu0 %v452
    %600 = vmatpush.bf16.msra.mxu0 %v451
    %601 = vmatpush.bf16.msra.mxu0 %v450
    %602 = vmatpush.bf16.msra.mxu0 %v449
    %603 = vmatpush.bf16.msra.mxu0 %v448
    %604 = vmatpush.bf16.msra.mxu0 %v447
    %605 = vmatpush.bf16.msra.mxu0 %v446
    %606 = vmatmul.bf16.gmra.mxu0 %v582
    %v607 = vpop.f32.mrf.mxu0
    %v608 = vadd.f32 %v473, %v607
    %v609 = vpop.f32.mrf.mxu0
    %v610 = vadd.f32 %v478, %v609
    %611 = vmatmul.bf16.gmra.mxu0 %v583
    %v612 = vpop.f32.mrf.mxu0
    %v613 = vadd.f32 %v483, %v612
    %v614 = vpop.f32.mrf.mxu0
    %v615 = vadd.f32 %v488, %v614
    %616 = vmatmul.bf16.gmra.mxu0 %v584
    %v617 = vpop.f32.mrf.mxu0
    %v618 = vadd.f32 %v493, %v617
    %v619 = vpop.f32.mrf.mxu0
    %v620 = vadd.f32 %v498, %v619
    %621 = vmatmul.bf16.gmra.mxu0 %v585
    %v622 = vpop.f32.mrf.mxu0
    %v623 = vadd.f32 %v503, %v622
    %v624 = vpop.f32.mrf.mxu0
    %v625 = vadd.f32 %v508, %v624
    %626 = vmatmul.bf16.gmra.mxu0 %v586
    %v627 = vpop.f32.mrf.mxu0
    %v628 = vadd.f32 %v513, %v627
    %v629 = vpop.f32.mrf.mxu0
    %v630 = vadd.f32 %v518, %v629
    %631 = vmatmul.bf16.gmra.mxu0 %v587
    %v632 = vpop.f32.mrf.mxu0
    %v633 = vadd.f32 %v523, %v632
    %v634 = vpop.f32.mrf.mxu0
    %v635 = vadd.f32 %v528, %v634
    %636 = vmatmul.bf16.gmra.mxu0 %v588
    %v637 = vpop.f32.mrf.mxu0
    %v638 = vadd.f32 %v533, %v637
    %v639 = vpop.f32.mrf.mxu0
    %v640 = vadd.f32 %v538, %v639
    %641 = vmatmul.bf16.gmra.mxu0 %v589
    %v642 = vpop.f32.mrf.mxu0
    %v643 = vadd.f32 %v543, %v642
    %v644 = vpop.f32.mrf.mxu0
    %v645 = vadd.f32 %v548, %v644
    %646 = vdwg.mxu0
    %v647 = vmax.f32 %v608, 0.0
    %v648 = vmax.f32 %v610, 0.0
    %v649 = vmax.f32 %v613, 0.0
    %v650 = vmax.f32 %v615, 0.0
    %v651 = vmax.f32 %v618, 0.0
    %v652 = vmax.f32 %v620, 0.0
    %v653 = vmax.f32 %v623, 0.0
    %v654 = vmax.f32 %v625, 0.0
    %v655 = vmax.f32 %v628, 0.0
    %v656 = vmax.f32 %v630, 0.0
    %v657 = vmax.f32 %v633, 0.0
    %v658 = vmax.f32 %v635, 0.0
    %v659 = vmax.f32 %v638, 0.0
    %v660 = vmax.f32 %v640, 0.0
    %v661 = vmax.f32 %v643, 0.0
    %v662 = vmax.f32 %v645, 0.0
    %v663 = vld [vmem:[%s7] sm:$0xf]
    %v664 = vld [vmem:[%s7 + $0x4] sm:$0xf]
    %v665 = vld [vmem:[%s7 + $0x8] sm:$0xf]
    %v666 = vld [vmem:[%s7 + $0xc] sm:$0xf]
    %v667 = vld [vmem:[%s7 + $0x10] sm:$0xf]
    %v668 = vld [vmem:[%s7 + $0x14] sm:$0xf]
    %v669 = vld [vmem:[%s7 + $0x18] sm:$0xf]
    %v670 = vld [vmem:[%s7 + $0x1c] sm:$0xf]
    %v671 = vpack.c.bf16 %v648, %v647
    %v672 = vpack.c.bf16 %v650, %v649
    %v673 = vpack.c.bf16 %v652, %v651
    %v674 = vpack.c.bf16 %v654, %v653
    %v675 = vpack.c.bf16 %v656, %v655
    %v676 = vpack.c.bf16 %v658, %v657
    %v677 = vpack.c.bf16 %v660, %v659
    %v678 = vpack.c.bf16 %v662, %v661
    %v679 = vld [vmem:[%s8] sm:$0xff]
    %v680 = vld [vmem:[%s8 + $0x8] sm:$0xff]
    %v681 = vld [vmem:[%s8 + $0x10] sm:$0xff]
    %v682 = vld [vmem:[%s8 + $0x18] sm:$0xff]
    %v683 = vld [vmem:[%s8 + $0x20] sm:$0xff]
    %v684 = vld [vmem:[%s8 + $0x28] sm:$0xff]
    %v685 = vld [vmem:[%s8 + $0x30] sm:$0xff]
    %v686 = vld [vmem:[%s8 + $0x38] sm:$0xff]
    %688 = vset.pattern.permute.xlu0 0
    %689 = vperm.xlu0 %688, %v679
    %v690 = vpop.permute.xlu0 %689
    %693 = vset.pattern.permute.xlu0 0
    %694 = vperm.xlu0 %693, %v680
    %v695 = vpop.permute.xlu0 %694
    %698 = vset.pattern.permute.xlu0 0
    %699 = vperm.xlu0 %698, %v681
    %v700 = vpop.permute.xlu0 %699
    %703 = vset.pattern.permute.xlu0 0
    %704 = vperm.xlu0 %703, %v682
    %v705 = vpop.permute.xlu0 %704
    %708 = vset.pattern.permute.xlu0 0
    %709 = vperm.xlu0 %708, %v683
    %v710 = vpop.permute.xlu0 %709
    %713 = vset.pattern.permute.xlu0 0
    %714 = vperm.xlu0 %713, %v684
    %v715 = vpop.permute.xlu0 %714
    %718 = vset.pattern.permute.xlu0 0
    %719 = vperm.xlu0 %718, %v685
    %v720 = vpop.permute.xlu0 %719
    %723 = vset.pattern.permute.xlu0 0
    %724 = vperm.xlu0 %723, %v686
    %v725 = vpop.permute.xlu0 %724
    %v735 = vunpack.c.l.b16 %v663
    %v736 = vunpack.c.l.b16 %v664
    %v737 = vunpack.c.l.b16 %v665
    %v738 = vunpack.c.l.b16 %v666
    %v739 = vunpack.c.l.b16 %v667
    %v740 = vunpack.c.l.b16 %v668
    %v741 = vunpack.c.l.b16 %v669
    %v742 = vunpack.c.l.b16 %v670
    %v743 = vpack.c.b16 %v736, %v735
    %v744 = vpack.c.b16 %v738, %v737
    %v745 = vpack.c.b16 %v740, %v739
    %v746 = vpack.c.b16 %v742, %v741
    %751 = vmatpush.bf16.msra.mxu0 %v678
    %752 = vmatpush.bf16.msra.mxu0 %v677
    %753 = vmatpush.bf16.msra.mxu0 %v676
    %754 = vmatpush.bf16.msra.mxu0 %v675
    %755 = vmatpush.bf16.msra.mxu0 %v674
    %756 = vmatpush.bf16.msra.mxu0 %v673
    %757 = vmatpush.bf16.msra.mxu0 %v672
    %758 = vmatpush.bf16.msra.mxu0 %v671
    %759 = vmatmul.bf16.gmra.mxu0 %v743
    %v760 = vpop.f32.mrf.mxu0
    %v761 = vadd.f32 %v690, %v760
    %v762 = vpop.f32.mrf.mxu0
    %v763 = vadd.f32 %v695, %v762
    %764 = vmatmul.bf16.gmra.mxu0 %v744
    %v765 = vpop.f32.mrf.mxu0
    %v766 = vadd.f32 %v700, %v765
    %v767 = vpop.f32.mrf.mxu0
    %v768 = vadd.f32 %v705, %v767
    %769 = vmatmul.bf16.gmra.mxu0 %v745
    %v770 = vpop.f32.mrf.mxu0
    %v771 = vadd.f32 %v710, %v770
    %v772 = vpop.f32.mrf.mxu0
    %v773 = vadd.f32 %v715, %v772
    %774 = vmatmul.bf16.gmra.mxu0 %v746
    %v775 = vpop.f32.mrf.mxu0
    %v776 = vadd.f32 %v720, %v775
    %v777 = vpop.f32.mrf.mxu0
    %v778 = vadd.f32 %v725, %v777
    %779 = vdwg.mxu0
    %v780 = vmax.f32 %v761, 0.0
    %v781 = vmax.f32 %v763, 0.0
    %v782 = vmax.f32 %v766, 0.0
    %v783 = vmax.f32 %v768, 0.0
    %v784 = vmax.f32 %v771, 0.0
    %v785 = vmax.f32 %v773, 0.0
    %v786 = vmax.f32 %v776, 0.0
    %v787 = vmax.f32 %v778, 0.0
    %v788 = vld [vmem:[%s9] sm:$0xff]
    %v789 = vld [vmem:[%s9 + $0x8] sm:$0xff]
    %v790 = vld [vmem:[%s9 + $0x10] sm:$0xff]
    %v791 = vld [vmem:[%s9 + $0x18] sm:$0xff]
    %v792 = vld [vmem:[%s9 + $0x20] sm:$0xff]
    %v793 = vld [vmem:[%s9 + $0x28] sm:$0xff]
    %v794 = vld [vmem:[%s9 + $0x30] sm:$0xff]
    %v795 = vld [vmem:[%s9 + $0x38] sm:$0xff]
    %797 = vset.pattern.permute.xlu0 0
    %798 = vperm.xlu0 %797, %v788
    %v799 = vpop.permute.xlu0 %798
    %802 = vset.pattern.permute.xlu0 0
    %803 = vperm.xlu0 %802, %v789
    %v804 = vpop.permute.xlu0 %803
    %807 = vset.pattern.permute.xlu0 0
    %808 = vperm.xlu0 %807, %v790
    %v809 = vpop.permute.xlu0 %808
    %812 = vset.pattern.permute.xlu0 0
    %813 = vperm.xlu0 %812, %v791
    %v814 = vpop.permute.xlu0 %813
    %817 = vset.pattern.permute.xlu0 0
    %818 = vperm.xlu0 %817, %v792
    %v819 = vpop.permute.xlu0 %818
    %822 = vset.pattern.permute.xlu0 0
    %823 = vperm.xlu0 %822, %v793
    %v824 = vpop.permute.xlu0 %823
    %827 = vset.pattern.permute.xlu0 0
    %828 = vperm.xlu0 %827, %v794
    %v829 = vpop.permute.xlu0 %828
    %832 = vset.pattern.permute.xlu0 0
    %833 = vperm.xlu0 %832, %v795
    %v834 = vpop.permute.xlu0 %833
    %v836 = vmul.f32 %v780, %v799
    %v837 = vmul.f32 %v781, %v804
    %v838 = vmul.f32 %v782, %v809
    %v839 = vmul.f32 %v783, %v814
    %v840 = vmul.f32 %v784, %v819
    %v841 = vmul.f32 %v785, %v824
    %v842 = vmul.f32 %v786, %v829
    %v843 = vmul.f32 %v787, %v834
    %vm844 = vcmask 64512
    %v845 = vsel %vm844, %v836, 0.0
    %v846 = vsel %vm844, %v837, 0.0
    %v847 = vadd.f32 %v845, %v846
    %v848 = vsel %vm844, %v838, 0.0
    %v849 = vadd.f32 %v847, %v848
    %v850 = vsel %vm844, %v839, 0.0
    %v851 = vadd.f32 %v849, %v850
    %v852 = vsel %vm844, %v840, 0.0
    %v853 = vadd.f32 %v851, %v852
    %v854 = vsel %vm844, %v841, 0.0
    %v855 = vadd.f32 %v853, %v854
    %v856 = vsel %vm844, %v842, 0.0
    %v857 = vadd.f32 %v855, %v856
    %v858 = vsel %vm844, %v843, 0.0
    %v859 = vadd.f32 %v857, %v858
    %v860 = vrot.slane %v859, 4
    %v861 = vadd.f32 %v859, %v860
    %v862 = vrot.slane %v861, 2
    %v863 = vadd.f32 %v861, %v862
    %v864 = vrot.slane %v863, 1
    %v865 = vadd.f32 %v863, %v864
    %v866 = vld [vmem:[#allocation2] sm:$0x1]
    %868 = vset.pattern.permute.xlu0 0
    %869 = vperm.xlu0 %868, %v866
    %v870 = vpop.permute.xlu0 %869
    %v872 = vperm.slane %v870, 0
    %v873 = vadd.f32 %v865, %v872
    %vm874 = vcmask 57344
    %875 = vst.msk [vmem:[#allocation3] sm:$0x1] %vm874, %v873
    // Predicated region
    $region46: #{critic_forward.1} parent=1 // pred_check
      _
    $region47: #{critic_forward.1} parent=1 // pred_check_branch
      %877 = sbr.rel (0) target = $region49
    $region48: #{critic_forward.1} parent=1 // pred_region
      %879 = vsyncadd [#allocation4], 0
      %s881 = sshll.u32 [#allocation3], 4
      %s882 = int_to_ptr.vmem [resolvable:$true] %s881
      %s883 = sshll.u32 %s11, 4
      %s884 = int_to_ptr.hbm [resolvable:$true] %s883
      %886 = dma.vmem_to_hbm [thread:$0]  %s882, 16, %s884, [#allocation4]
    $region49: #{critic_forward.1} parent=1 // pred_fallthru
      _
    // Predicated region
    $region50: #{critic_forward.1} parent=1 // pred_check
      _
    $region51: #{critic_forward.1} parent=1 // pred_check_branch
      %888 = sbr.rel (0) target = $region53
    $region52: #{critic_forward.1} parent=1 // pred_region
      %890 = dma.done [#allocation4], 16
    $region53: #{critic_forward.1} parent=1 // pred_fallthru
      _
    %891 = vsyncpa [#allocation4], 1

</llo_original>
